<compile_context>
chip_gen: v7x
topology: tpu7x:2x2x1
jax: 0.10.0
libtpu: 0.0.40
codegen_flags: <defaults>
</compile_context>

<pallas_src>
from functools import partial

import jax
import jax.numpy as jnp
from jax.experimental import pallas as pl
from jax.experimental.pallas import tpu as pltpu


def _rx_kernel(x_ref,
               w1_ref, b1_ref,
               w2_ref, b2_ref,
               w3_ref, b3_ref,
               w4_ref, b4_ref,
               o_ref):
    """Fused MLP forward for one batch tile (batch on the lane axis).

    x_ref : (Do, TM)     bf16
    w1    : (H, Do)      bf16      b1    : (H, 1)     f32
    w2/w3 : (H, H)       bf16      b2/b3 : (H, 1)     f32
    w4    : (nbins, H)   bf16      b4    : (nbins, 1) f32
    o_ref : (nbins, TM)
    """
    h = jnp.dot(w1_ref[...], x_ref[...], preferred_element_type=jnp.float32)
    h = jnp.maximum(h + b1_ref[...], 0.0).astype(jnp.bfloat16)

    h = jnp.dot(w2_ref[...], h, preferred_element_type=jnp.float32)
    h = jnp.maximum(h + b2_ref[...], 0.0).astype(jnp.bfloat16)

    h = jnp.dot(w3_ref[...], h, preferred_element_type=jnp.float32)
    h = jnp.maximum(h + b3_ref[...], 0.0).astype(jnp.bfloat16)

    out = jnp.dot(w4_ref[...], h, preferred_element_type=jnp.float32) + b4_ref[...]
    o_ref[...] = out.astype(o_ref.dtype)


def prepare_rx_params(params):
    """Cast torch-layout params once for the kernel (call outside the hot loop).

    Input:  w1..w4 in (out, in) layout, b1..b4 of shape (out,) or (out, 1).
    Output: bf16 weights, f32 column biases.
    """
    def bias(b):
        return jnp.asarray(b, jnp.float32).reshape(-1, 1)

    return dict(
        w1=jnp.asarray(params["w1"], jnp.bfloat16), b1=bias(params["b1"]),
        w2=jnp.asarray(params["w2"], jnp.bfloat16), b2=bias(params["b2"]),
        w3=jnp.asarray(params["w3"], jnp.bfloat16), b3=bias(params["b3"]),
        w4=jnp.asarray(params["w4"], jnp.bfloat16), b4=bias(params["b4"]),
    )


def _pick_tile(B, tile_m):
    """Static (shape-only) tile selection.

    - round the request to a multiple of 128 (lane width),
    - never exceed the 128-padded batch,
    - keep >= 2 grid steps whenever the padded batch allows so the single
      "parallel" axis can shard across both v7x TensorCores.
    """
    tm = max(128, (int(tile_m) // 128) * 128)
    b128 = pl.cdiv(B, 128) * 128
    tm = min(tm, b128)
    if b128 >= 256:
        half = max(128, ((b128 // 2) // 128) * 128)
        tm = min(tm, half)
    b_pad = pl.cdiv(B, tm) * tm
    return tm, b_pad


@partial(jax.jit, static_argnames=("tile_m", "out_dtype", "transposed_output"))
def _rx_forward_jit(x, p, *, tile_m, out_dtype, transposed_output):
    B, Do = x.shape
    hidden = p["w1"].shape[0]
    nbins = p["w4"].shape[0]

    tm, b_pad = _pick_tile(B, tile_m)

    # Batch on lanes; bf16 halves the input DMA.  Fused with the pallas_call by jit.
    x_t = x.T.astype(jnp.bfloat16)                     # (Do, B)
    if b_pad != B:
        x_t = jnp.pad(x_t, ((0, 0), (0, b_pad - B)))   # (Do, b_pad)

    grid = (b_pad // tm,)
    x_spec = pl.BlockSpec((Do, tm), lambda i: (0, i))
    out_spec = pl.BlockSpec((nbins, tm), lambda i: (0, i))

    def resident(shape):
        # Constant index_map -> block never changes; Pallas keeps it VMEM-resident
        # and skips re-DMA across grid steps.
        return pl.BlockSpec(shape, lambda i: (0, 0))

    in_specs = [
        x_spec,
        resident(p["w1"].shape), resident(p["b1"].shape),
        resident(p["w2"].shape), resident(p["b2"].shape),
        resident(p["w3"].shape), resident(p["b3"].shape),
        resident(p["w4"].shape), resident(p["b4"].shape),
    ]

    out_t = pl.pallas_call(
        _rx_kernel,
        out_shape=jax.ShapeDtypeStruct((nbins, b_pad), out_dtype),
        grid_spec=pltpu.PrefetchScalarGridSpec(
            num_scalar_prefetch=0,
            grid=grid,
            in_specs=in_specs,
            out_specs=out_spec,
        ),
        compiler_params=pltpu.CompilerParams(
            dimension_semantics=("parallel",),
            # Headroom for large tile sweeps (covers v5e's 16 MiB scoped default);
            # safe on every generation including v7x's 64 MiB physical VMEM.
            vmem_limit_bytes=32 * 1024 * 1024,
        ),
    )(x_t, p["w1"], p["b1"], p["w2"], p["b2"], p["w3"], p["b3"], p["w4"], p["b4"])

    if transposed_output:
        return out_t[:, :B]          # (nbins, B) — no extra HBM transpose
    return out_t[:, :B].T            # (B, nbins) — torch layout (fused under jit)


def rx_forward(x, prepared_params, *, tile_m=4096, out_dtype=jnp.float32,
               transposed_output=False):
    """Rx forward pass.

    x: (B, Do) float32.
    prepared_params: output of prepare_rx_params (bf16 weights, f32 (out,1) biases).
    Returns (B, nbins) in out_dtype (or (nbins, B) if transposed_output=True).
    """
    return _rx_forward_jit(x, prepared_params, tile_m=tile_m, out_dtype=out_dtype,
                           transposed_output=transposed_output)


def init_rx_params(key, Do=6, hidden=64, nbins=40):
    """Deterministic init matching the nn.Linear shapes of Rx.__init__ (torch layout)."""
    keys = jax.random.split(key, 8)

    def linear(kw, kb, fan_in, fan_out):
        # PyTorch Linear default init: U(-1/sqrt(fan_in), 1/sqrt(fan_in)).
        bound = 1.0 / jnp.sqrt(jnp.float32(fan_in))
        w = jax.random.uniform(kw, (fan_out, fan_in), jnp.float32, -bound, bound)  # (out, in)
        b = jax.random.uniform(kb, (fan_out, 1), jnp.float32, -bound, bound)       # (out, 1)
        return w, b

    w1, b1 = linear(keys[0], keys[1], Do, hidden)
    w2, b2 = linear(keys[2], keys[3], hidden, hidden)
    w3, b3 = linear(keys[4], keys[5], hidden, hidden)
    w4, b4 = linear(keys[6], keys[7], hidden, nbins)
    return dict(w1=w1, b1=b1, w2=w2, b2=b2, w3=w3, b3=b3, w4=w4, b4=b4)


def rx_reference(x, p, *, bf16=True):
    """Pure-JAX reference. bf16=True mirrors the kernel's bf16-matmul / f32-acc path."""
    def cast(a):
        return a.astype(jnp.bfloat16) if bf16 else a

    h = x
    for name, relu in (("1", True), ("2", True), ("3", True), ("4", False)):
        w, b = p["w" + name], p["b" + name]
        h = jnp.dot(cast(h), cast(w).T, preferred_element_type=jnp.float32) + b.reshape(1, -1)
        if relu:
            h = jnp.maximum(h, 0.0)
    return h


if __name__ == "__main__":
    key = jax.random.PRNGKey(0)
    k_param, k_x = jax.random.split(key)

    Do, hidden, nbins = 6, 64, 40
    batch = 200  # not a multiple of the tile: exercises padding and a 2-step grid

    params = init_rx_params(k_param, Do=Do, hidden=hidden, nbins=nbins)
    prepared = prepare_rx_params(params)   # one-time bf16/f32 cast, cached by caller
    x = jax.random.normal(k_x, (batch, Do), dtype=jnp.float32)

    out = jax.block_until_ready(rx_forward(x, prepared))

    ref_bf16 = rx_reference(x, params, bf16=True)   # same bf16/f32-acc numerics
    ref_f32 = rx_reference(x, params, bf16=False)   # full-precision sanity check

    assert out.shape == (batch, nbins)
    assert jnp.allclose(out, ref_bf16, atol=1e-2, rtol=1e-2), "mismatch vs bf16 reference"
    assert jnp.allclose(out, ref_f32, atol=5e-2, rtol=5e-2), "mismatch vs f32 reference"

    # Also exercise the no-output-transpose path once.
    out_t = jax.block_until_ready(rx_forward(x, prepared, transposed_output=True))
    assert out_t.shape == (nbins, batch)
    assert jnp.allclose(out_t.T, ref_bf16, atol=1e-2, rtol=1e-2)

    print("KERNEL_OK")
</pallas_src>

<mosaic_0001>
module attributes {stable_mosaic.version = 11 : i64} {
  func.func @_rx_kernel(%arg0: i32, %arg1: memref<6x128xbf16, #tpu.memory_space<vmem>>, %arg2: memref<64x6xbf16, #tpu.memory_space<vmem>>, %arg3: memref<64x1xf32, #tpu.memory_space<vmem>>, %arg4: memref<64x64xbf16, #tpu.memory_space<vmem>>, %arg5: memref<64x1xf32, #tpu.memory_space<vmem>>, %arg6: memref<64x64xbf16, #tpu.memory_space<vmem>>, %arg7: memref<64x1xf32, #tpu.memory_space<vmem>>, %arg8: memref<40x64xbf16, #tpu.memory_space<vmem>>, %arg9: memref<40x1xf32, #tpu.memory_space<vmem>>, %arg10: memref<40x128xf32, #tpu.memory_space<vmem>>) attributes {dimension_semantics = [#tpu.dimension_semantics<parallel>], iteration_bounds = array<i64: 2>, scalar_prefetch = 0 : i64, scratch_operands = 0 : i64, tpu.core_type = #tpu.core_type<tc>, window_params = [{transform_indices = @transform_0, window_bounds = array<i64: 6, 128>}, {pipeline_mode = #tpu.pipeline_mode<synchronous>, transform_indices = @transform_1, window_bounds = array<i64: 64, 6>}, {pipeline_mode = #tpu.pipeline_mode<synchronous>, transform_indices = @transform_2, window_bounds = array<i64: 64, 1>}, {pipeline_mode = #tpu.pipeline_mode<synchronous>, transform_indices = @transform_3, window_bounds = array<i64: 64, 64>}, {pipeline_mode = #tpu.pipeline_mode<synchronous>, transform_indices = @transform_4, window_bounds = array<i64: 64, 1>}, {pipeline_mode = #tpu.pipeline_mode<synchronous>, transform_indices = @transform_5, window_bounds = array<i64: 64, 64>}, {pipeline_mode = #tpu.pipeline_mode<synchronous>, transform_indices = @transform_6, window_bounds = array<i64: 64, 1>}, {pipeline_mode = #tpu.pipeline_mode<synchronous>, transform_indices = @transform_7, window_bounds = array<i64: 40, 64>}, {pipeline_mode = #tpu.pipeline_mode<synchronous>, transform_indices = @transform_8, window_bounds = array<i64: 40, 1>}, {transform_indices = @transform_9, window_bounds = array<i64: 40, 128>}]} {
    %c0 = arith.constant 0 : index
    %c0_0 = arith.constant 0 : index
    %0 = vector.load %arg2[%c0, %c0_0] : memref<64x6xbf16, #tpu.memory_space<vmem>>, vector<64x6xbf16>
    %c0_1 = arith.constant 0 : index
    %c0_2 = arith.constant 0 : index
    %1 = vector.load %arg1[%c0_1, %c0_2] : memref<6x128xbf16, #tpu.memory_space<vmem>>, vector<6x128xbf16>
    %cst = arith.constant dense<0.000000e+00> : vector<64x128xf32>
    %2 = tpu.matmul %0, %1, %cst {dimension_numbers = #tpu.dot_dimension_numbers<[1], [0], [0], [1], [0, 0, 1, 1], [], []>} : vector<64x6xbf16>, vector<6x128xbf16>, vector<64x128xf32> -> vector<64x128xf32>
    %c0_3 = arith.constant 0 : index
    %c0_4 = arith.constant 0 : index
    %3 = vector.load %arg3[%c0_3, %c0_4] : memref<64x1xf32, #tpu.memory_space<vmem>>, vector<64x1xf32>
    %4 = vector.broadcast %3 : vector<64x1xf32> to vector<64x128xf32>
    %5 = arith.addf %2, %4 : vector<64x128xf32>
    %cst_5 = arith.constant 0.000000e+00 : f32
    %6 = vector.broadcast %cst_5 : f32 to vector<64x128xf32>
    %7 = arith.maximumf %5, %6 : vector<64x128xf32>
    %8 = arith.truncf %7 : vector<64x128xf32> to vector<64x128xbf16>
    %c0_6 = arith.constant 0 : index
    %c0_7 = arith.constant 0 : index
    %9 = vector.load %arg4[%c0_6, %c0_7] : memref<64x64xbf16, #tpu.memory_space<vmem>>, vector<64x64xbf16>
    %cst_8 = arith.constant dense<0.000000e+00> : vector<64x128xf32>
    %10 = tpu.matmul %9, %8, %cst_8 {dimension_numbers = #tpu.dot_dimension_numbers<[1], [0], [0], [1], [0, 0, 1, 1], [], []>} : vector<64x64xbf16>, vector<64x128xbf16>, vector<64x128xf32> -> vector<64x128xf32>
    %c0_9 = arith.constant 0 : index
    %c0_10 = arith.constant 0 : index
    %11 = vector.load %arg5[%c0_9, %c0_10] : memref<64x1xf32, #tpu.memory_space<vmem>>, vector<64x1xf32>
    %12 = vector.broadcast %11 : vector<64x1xf32> to vector<64x128xf32>
    %13 = arith.addf %10, %12 : vector<64x128xf32>
    %cst_11 = arith.constant 0.000000e+00 : f32
    %14 = vector.broadcast %cst_11 : f32 to vector<64x128xf32>
    %15 = arith.maximumf %13, %14 : vector<64x128xf32>
    %16 = arith.truncf %15 : vector<64x128xf32> to vector<64x128xbf16>
    %c0_12 = arith.constant 0 : index
    %c0_13 = arith.constant 0 : index
    %17 = vector.load %arg6[%c0_12, %c0_13] : memref<64x64xbf16, #tpu.memory_space<vmem>>, vector<64x64xbf16>
    %cst_14 = arith.constant dense<0.000000e+00> : vector<64x128xf32>
    %18 = tpu.matmul %17, %16, %cst_14 {dimension_numbers = #tpu.dot_dimension_numbers<[1], [0], [0], [1], [0, 0, 1, 1], [], []>} : vector<64x64xbf16>, vector<64x128xbf16>, vector<64x128xf32> -> vector<64x128xf32>
    %c0_15 = arith.constant 0 : index
    %c0_16 = arith.constant 0 : index
    %19 = vector.load %arg7[%c0_15, %c0_16] : memref<64x1xf32, #tpu.memory_space<vmem>>, vector<64x1xf32>
    %20 = vector.broadcast %19 : vector<64x1xf32> to vector<64x128xf32>
    %21 = arith.addf %18, %20 : vector<64x128xf32>
    %cst_17 = arith.constant 0.000000e+00 : f32
    %22 = vector.broadcast %cst_17 : f32 to vector<64x128xf32>
    %23 = arith.maximumf %21, %22 : vector<64x128xf32>
    %24 = arith.truncf %23 : vector<64x128xf32> to vector<64x128xbf16>
    %c0_18 = arith.constant 0 : index
    %c0_19 = arith.constant 0 : index
    %25 = vector.load %arg8[%c0_18, %c0_19] : memref<40x64xbf16, #tpu.memory_space<vmem>>, vector<40x64xbf16>
    %cst_20 = arith.constant dense<0.000000e+00> : vector<40x128xf32>
    %26 = tpu.matmul %25, %24, %cst_20 {dimension_numbers = #tpu.dot_dimension_numbers<[1], [0], [0], [1], [0, 0, 1, 1], [], []>} : vector<40x64xbf16>, vector<64x128xbf16>, vector<40x128xf32> -> vector<40x128xf32>
    %c0_21 = arith.constant 0 : index
    %c0_22 = arith.constant 0 : index
    %27 = vector.load %arg9[%c0_21, %c0_22] : memref<40x1xf32, #tpu.memory_space<vmem>>, vector<40x1xf32>
    %28 = vector.broadcast %27 : vector<40x1xf32> to vector<40x128xf32>
    %29 = arith.addf %26, %28 : vector<40x128xf32>
    %c0_23 = arith.constant 0 : index
    %c0_24 = arith.constant 0 : index
    %30 = vector.load %arg10[%c0_23, %c0_24] : memref<40x128xf32, #tpu.memory_space<vmem>>, vector<40x128xf32>
    tpu.vector_store %arg10[%c0_23, %c0_24], %29 {strides = array<i32>} : memref<40x128xf32, #tpu.memory_space<vmem>>, vector<40x128xf32>,
    return
  }
  func.func @transform_0(%arg0: i32) -> (i32, i32) {
    %c0_i32 = arith.constant 0 : i32
    %c0_i32_0 = arith.constant 0 : i32
    return %c0_i32, %arg0 : i32, i32
  }
  func.func @transform_1(%arg0: i32) -> (i32, i32) {
    %c0_i32 = arith.constant 0 : i32
    %c0_i32_0 = arith.constant 0 : i32
    %c0_i32_1 = arith.constant 0 : i32
    return %c0_i32, %c0_i32_0 : i32, i32
  }
  func.func @transform_2(%arg0: i32) -> (i32, i32) {
    %c0_i32 = arith.constant 0 : i32
    %c0_i32_0 = arith.constant 0 : i32
    %c0_i32_1 = arith.constant 0 : i32
    return %c0_i32, %c0_i32_0 : i32, i32
  }
  func.func @transform_3(%arg0: i32) -> (i32, i32) {
    %c0_i32 = arith.constant 0 : i32
    %c0_i32_0 = arith.constant 0 : i32
    %c0_i32_1 = arith.constant 0 : i32
    return %c0_i32, %c0_i32_0 : i32, i32
  }
  func.func @transform_4(%arg0: i32) -> (i32, i32) {
    %c0_i32 = arith.constant 0 : i32
    %c0_i32_0 = arith.constant 0 : i32
    %c0_i32_1 = arith.constant 0 : i32
    return %c0_i32, %c0_i32_0 : i32, i32
  }
  func.func @transform_5(%arg0: i32) -> (i32, i32) {
    %c0_i32 = arith.constant 0 : i32
    %c0_i32_0 = arith.constant 0 : i32
    %c0_i32_1 = arith.constant 0 : i32
    return %c0_i32, %c0_i32_0 : i32, i32
  }
  func.func @transform_6(%arg0: i32) -> (i32, i32) {
    %c0_i32 = arith.constant 0 : i32
    %c0_i32_0 = arith.constant 0 : i32
    %c0_i32_1 = arith.constant 0 : i32
    return %c0_i32, %c0_i32_0 : i32, i32
  }
  func.func @transform_7(%arg0: i32) -> (i32, i32) {
    %c0_i32 = arith.constant 0 : i32
    %c0_i32_0 = arith.constant 0 : i32
    %c0_i32_1 = arith.constant 0 : i32
    return %c0_i32, %c0_i32_0 : i32, i32
  }
  func.func @transform_8(%arg0: i32) -> (i32, i32) {
    %c0_i32 = arith.constant 0 : i32
    %c0_i32_0 = arith.constant 0 : i32
    %c0_i32_1 = arith.constant 0 : i32
    return %c0_i32, %c0_i32_0 : i32, i32
  }
  func.func @transform_9(%arg0: i32) -> (i32, i32) {
    %c0_i32 = arith.constant 0 : i32
    %c0_i32_0 = arith.constant 0 : i32
    return %c0_i32, %arg0 : i32, i32
  }
}

</mosaic_0001>

<llo_original>
// kernel: _rx_forward_jit.1
$region0: #{_rx_forward_jit.1}
  #allocation0 [shape = 'u32[]', space=smem, size = 0x4, offset = 0x4, fixed_abs, tag = 'smem constant byte address 0x4 - core index']
  #allocation1 [shape = 'u32[144,128]{1,0:T(1,128)}', space=vmem, size = 0x12000, scoped, tag = 'internal scratch']
  %s0 = inlined_call_operand.vmem [shape: bf16[6,256], index: 0, kind: input, shape index: {}]
  %s1 = inlined_call_operand.vmem [shape: bf16[64,6], index: 1, kind: input, shape index: {}]
  %s2 = inlined_call_operand.vmem [shape: f32[64,1], index: 2, kind: input, shape index: {}]
  %s3 = inlined_call_operand.vmem [shape: bf16[64,64], index: 3, kind: input, shape index: {}]
  %s4 = inlined_call_operand.vmem [shape: f32[64,1], index: 4, kind: input, shape index: {}]
  %s5 = inlined_call_operand.vmem [shape: bf16[64,64], index: 5, kind: input, shape index: {}]
  %s6 = inlined_call_operand.vmem [shape: f32[64,1], index: 6, kind: input, shape index: {}]
  %s7 = inlined_call_operand.vmem [shape: bf16[40,64], index: 7, kind: input, shape index: {}]
  %s8 = inlined_call_operand.vmem [shape: f32[40,1], index: 8, kind: input, shape index: {}]
  %s9 = inlined_call_operand.vmem [shape: f32[40,256], index: 9, kind: output, shape index: {}]
  %s10 = sld [smem:[#allocation0]]
  $region103: #{_rx_forward_jit.1} parent=0
    _
  %s12 = ssub.s32 1, %s10
  %s13 = scalar_select 0, %s12, %s10
  $region1: #{_rx_forward_jit.1} parent=0
    #allocation2 [shape = 'u8[40960]{0}', space=vmem, size = 0xa000, scoped, tag = 'output window, operand 0']
    loop: start=0, step=1, limit=4
    $region2: #{_rx_forward_jit.1} parent=1 // loop_pre_header
      _
    $region3: #{_rx_forward_jit.1} parent=1 // loop_header
      %s15 = sphi 0, %s19
      %p16 = scmp.ge.s32.totalorder %s15, 4
      %s25 = sphi 0, %s27
      %s28 = sphi 0, %s25
      %s29 = sphi 0, %s28
      %s45 = sphi 0, %s29
      %s49 = sphi 0, %s49
      %s51 = sphi 0, %s49
      %s52 = sphi 0, %s51
      %s66 = sphi 0, %s52
      %s70 = sphi 0, %s70
      %s72 = sphi 0, %s70
      %s73 = sphi 0, %s72
      %s87 = sphi 0, %s73
      %s91 = sphi 0, %s91
      %s93 = sphi 0, %s91
      %s94 = sphi 0, %s93
      %s108 = sphi 0, %s94
      %s112 = sphi 0, %s112
      %s114 = sphi 0, %s112
      %s115 = sphi 0, %s114
      %s129 = sphi 0, %s115
      %s133 = sphi 0, %s133
      %s135 = sphi 0, %s133
      %s136 = sphi 0, %s135
      %s150 = sphi 0, %s136
      %s154 = sphi 0, %s154
      %s156 = sphi 0, %s154
      %s157 = sphi 0, %s156
      %s171 = sphi 0, %s157
      %s175 = sphi 0, %s175
      %s177 = sphi 0, %s175
      %s178 = sphi 0, %s177
      %s192 = sphi 0, %s178
      %s196 = sphi 0, %s196
      %s198 = sphi 0, %s196
      %s199 = sphi 0, %s198
      %s213 = sphi 0, %s199
      %s219 = sphi 0, %s221
      %s222 = sphi 0, %s219
      %s223 = sphi 0, %s222
      %s239 = sphi 0, %s223
    $region4: #{_rx_forward_jit.1} parent=1 // loop_header_branch
      %18 = sbr.rel (%p16) target = $region8
    $region5: #{_rx_forward_jit.1} parent=1 // loop_body
      %s20 = ssub.s32 %s15, 1
      %s21 = ssub.s32 %s15, 2
      %s22 = sadd.s32 %s15, 1
      %s23 = ssub.s32 %s15, %s22
      %p24 = scmp.eq.s32.totalorder %s23, 0
      %s26 = sadd.s32 %s25, 1
      %s27 = scalar_select %p24, %s25, %s26
      %p30 = pneg %p24
      %p31 = scmp.eq.s32.totalorder %s15, 1
      %p32 = por %p30, %p31
      %p33 = scmp.ne.s32.totalorder %s25, %s28
      %p34 = scmp.eq.s32.totalorder %s15, 0
      %p35 = por %p33, %p34
      %p36 = scmp.ne.s32.totalorder %s25, %s28
      %p37 = scmp.eq.s32.totalorder %s20, 1
      %p38 = por %p36, %p37
      %p39 = scmp.ne.s32.totalorder %s28, %s29
      %p40 = scmp.eq.s32.totalorder %s20, 0
      %p41 = por %p39, %p40
      %p42 = scmp.ne.s32.totalorder %s28, %s29
      %p43 = scmp.eq.s32.totalorder %s21, 1
      %p44 = por %p42, %p43
      %p46 = scmp.ne.s32.totalorder %s29, %s45
      %p47 = scmp.eq.s32.totalorder %s21, 0
      %p48 = por %p46, %p47
      %s50 = sadd.s32 %s49, 1
      %p53 = scmp.eq.s32.totalorder %s15, 1
      %p54 = scmp.ne.s32.totalorder %s49, %s51
      %p55 = scmp.eq.s32.totalorder %s15, 0
      %p56 = por %p54, %p55
      %p57 = scmp.ne.s32.totalorder %s49, %s51
      %p58 = scmp.eq.s32.totalorder %s20, 1
      %p59 = por %p57, %p58
      %p60 = scmp.ne.s32.totalorder %s51, %s52
      %p61 = scmp.eq.s32.totalorder %s20, 0
      %p62 = por %p60, %p61
      %p63 = scmp.ne.s32.totalorder %s51, %s52
      %p64 = scmp.eq.s32.totalorder %s21, 1
      %p65 = por %p63, %p64
      %p67 = scmp.ne.s32.totalorder %s52, %s66
      %p68 = scmp.eq.s32.totalorder %s21, 0
      %p69 = por %p67, %p68
      %s71 = sadd.s32 %s70, 1
      %p74 = scmp.eq.s32.totalorder %s15, 1
      %p75 = scmp.ne.s32.totalorder %s70, %s72
      %p76 = scmp.eq.s32.totalorder %s15, 0
      %p77 = por %p75, %p76
      %p78 = scmp.ne.s32.totalorder %s70, %s72
      %p79 = scmp.eq.s32.totalorder %s20, 1
      %p80 = por %p78, %p79
      %p81 = scmp.ne.s32.totalorder %s72, %s73
      %p82 = scmp.eq.s32.totalorder %s20, 0
      %p83 = por %p81, %p82
      %p84 = scmp.ne.s32.totalorder %s72, %s73
      %p85 = scmp.eq.s32.totalorder %s21, 1
      %p86 = por %p84, %p85
      %p88 = scmp.ne.s32.totalorder %s73, %s87
      %p89 = scmp.eq.s32.totalorder %s21, 0
      %p90 = por %p88, %p89
      %s92 = sadd.s32 %s91, 1
      %p95 = scmp.eq.s32.totalorder %s15, 1
      %p96 = scmp.ne.s32.totalorder %s91, %s93
      %p97 = scmp.eq.s32.totalorder %s15, 0
      %p98 = por %p96, %p97
      %p99 = scmp.ne.s32.totalorder %s91, %s93
      %p100 = scmp.eq.s32.totalorder %s20, 1
      %p101 = por %p99, %p100
      %p102 = scmp.ne.s32.totalorder %s93, %s94
      %p103 = scmp.eq.s32.totalorder %s20, 0
      %p104 = por %p102, %p103
      %p105 = scmp.ne.s32.totalorder %s93, %s94
      %p106 = scmp.eq.s32.totalorder %s21, 1
      %p107 = por %p105, %p106
      %p109 = scmp.ne.s32.totalorder %s94, %s108
      %p110 = scmp.eq.s32.totalorder %s21, 0
      %p111 = por %p109, %p110
      %s113 = sadd.s32 %s112, 1
      %p116 = scmp.eq.s32.totalorder %s15, 1
      %p117 = scmp.ne.s32.totalorder %s112, %s114
      %p118 = scmp.eq.s32.totalorder %s15, 0
      %p119 = por %p117, %p118
      %p120 = scmp.ne.s32.totalorder %s112, %s114
      %p121 = scmp.eq.s32.totalorder %s20, 1
      %p122 = por %p120, %p121
      %p123 = scmp.ne.s32.totalorder %s114, %s115
      %p124 = scmp.eq.s32.totalorder %s20, 0
      %p125 = por %p123, %p124
      %p126 = scmp.ne.s32.totalorder %s114, %s115
      %p127 = scmp.eq.s32.totalorder %s21, 1
      %p128 = por %p126, %p127
      %p130 = scmp.ne.s32.totalorder %s115, %s129
      %p131 = scmp.eq.s32.totalorder %s21, 0
      %p132 = por %p130, %p131
      %s134 = sadd.s32 %s133, 1
      %p137 = scmp.eq.s32.totalorder %s15, 1
      %p138 = scmp.ne.s32.totalorder %s133, %s135
      %p139 = scmp.eq.s32.totalorder %s15, 0
      %p140 = por %p138, %p139
      %p141 = scmp.ne.s32.totalorder %s133, %s135
      %p142 = scmp.eq.s32.totalorder %s20, 1
      %p143 = por %p141, %p142
      %p144 = scmp.ne.s32.totalorder %s135, %s136
      %p145 = scmp.eq.s32.totalorder %s20, 0
      %p146 = por %p144, %p145
      %p147 = scmp.ne.s32.totalorder %s135, %s136
      %p148 = scmp.eq.s32.totalorder %s21, 1
      %p149 = por %p147, %p148
      %p151 = scmp.ne.s32.totalorder %s136, %s150
      %p152 = scmp.eq.s32.totalorder %s21, 0
      %p153 = por %p151, %p152
      %s155 = sadd.s32 %s154, 1
      %p158 = scmp.eq.s32.totalorder %s15, 1
      %p159 = scmp.ne.s32.totalorder %s154, %s156
      %p160 = scmp.eq.s32.totalorder %s15, 0
      %p161 = por %p159, %p160
      %p162 = scmp.ne.s32.totalorder %s154, %s156
      %p163 = scmp.eq.s32.totalorder %s20, 1
      %p164 = por %p162, %p163
      %p165 = scmp.ne.s32.totalorder %s156, %s157
      %p166 = scmp.eq.s32.totalorder %s20, 0
      %p167 = por %p165, %p166
      %p168 = scmp.ne.s32.totalorder %s156, %s157
      %p169 = scmp.eq.s32.totalorder %s21, 1
      %p170 = por %p168, %p169
      %p172 = scmp.ne.s32.totalorder %s157, %s171
      %p173 = scmp.eq.s32.totalorder %s21, 0
      %p174 = por %p172, %p173
      %s176 = sadd.s32 %s175, 1
      %p179 = scmp.eq.s32.totalorder %s15, 1
      %p180 = scmp.ne.s32.totalorder %s175, %s177
      %p181 = scmp.eq.s32.totalorder %s15, 0
      %p182 = por %p180, %p181
      %p183 = scmp.ne.s32.totalorder %s175, %s177
      %p184 = scmp.eq.s32.totalorder %s20, 1
      %p185 = por %p183, %p184
      %p186 = scmp.ne.s32.totalorder %s177, %s178
      %p187 = scmp.eq.s32.totalorder %s20, 0
      %p188 = por %p186, %p187
      %p189 = scmp.ne.s32.totalorder %s177, %s178
      %p190 = scmp.eq.s32.totalorder %s21, 1
      %p191 = por %p189, %p190
      %p193 = scmp.ne.s32.totalorder %s178, %s192
      %p194 = scmp.eq.s32.totalorder %s21, 0
      %p195 = por %p193, %p194
      %s197 = sadd.s32 %s196, 1
      %p200 = scmp.eq.s32.totalorder %s15, 1
      %p201 = scmp.ne.s32.totalorder %s196, %s198
      %p202 = scmp.eq.s32.totalorder %s15, 0
      %p203 = por %p201, %p202
      %p204 = scmp.ne.s32.totalorder %s196, %s198
      %p205 = scmp.eq.s32.totalorder %s20, 1
      %p206 = por %p204, %p205
      %p207 = scmp.ne.s32.totalorder %s198, %s199
      %p208 = scmp.eq.s32.totalorder %s20, 0
      %p209 = por %p207, %p208
      %p210 = scmp.ne.s32.totalorder %s198, %s199
      %p211 = scmp.eq.s32.totalorder %s21, 1
      %p212 = por %p210, %p211
      %p214 = scmp.ne.s32.totalorder %s199, %s213
      %p215 = scmp.eq.s32.totalorder %s21, 0
      %p216 = por %p214, %p215
      %s217 = ssub.s32 %s15, %s22
      %p218 = scmp.eq.s32.totalorder %s217, 0
      %s220 = sadd.s32 %s219, 1
      %s221 = scalar_select %p218, %s219, %s220
      %p224 = pneg %p218
      %p225 = scmp.eq.s32.totalorder %s15, 1
      %p226 = por %p224, %p225
      %p227 = scmp.ne.s32.totalorder %s219, %s222
      %p228 = scmp.eq.s32.totalorder %s15, 0
      %p229 = por %p227, %p228
      %p230 = scmp.ne.s32.totalorder %s219, %s222
      %p231 = scmp.eq.s32.totalorder %s20, 1
      %p232 = por %p230, %p231
      %p233 = scmp.ne.s32.totalorder %s222, %s223
      %p234 = scmp.eq.s32.totalorder %s20, 0
      %p235 = por %p233, %p234
      %p236 = scmp.ne.s32.totalorder %s222, %s223
      %p237 = scmp.eq.s32.totalorder %s21, 1
      %p238 = por %p236, %p237
      %p240 = scmp.ne.s32.totalorder %s223, %s239
      %p241 = scmp.eq.s32.totalorder %s21, 0
      %p242 = por %p240, %p241
      %p243 = scmp.le.s32.totalorder 1, %s15
      %p244 = scmp.lt.s32.totalorder %s15, 3
      %p245 = pnand %p243, %p244
      %p246 = pneg %p245
      // Predicated region
      $region9: #{_rx_forward_jit.1} parent=5 // pred_check
        _
      $region10: #{_rx_forward_jit.1} parent=5 // pred_check_branch
        %248 = sbr.rel (%p245) target = $region12
      $region11: #{_rx_forward_jit.1} parent=5 // pred_region
        %s249 = ssub.s32 %s15, 1
        // Predicated region
        $region13: #{_rx_forward_jit.1} parent=11 // pred_check
          %p250 = pneg %p62
        $region14: #{_rx_forward_jit.1} parent=11 // pred_check_branch
          %252 = sbr.rel (%p250) target = $region16
        $region15: #{_rx_forward_jit.1} parent=11 // pred_region
          _
        $region16: #{_rx_forward_jit.1} parent=11 // pred_fallthru
          _
        // Predicated region
        $region17: #{_rx_forward_jit.1} parent=11 // pred_check
          %p253 = pneg %p83
        $region18: #{_rx_forward_jit.1} parent=11 // pred_check_branch
          %255 = sbr.rel (%p253) target = $region20
        $region19: #{_rx_forward_jit.1} parent=11 // pred_region
          _
        $region20: #{_rx_forward_jit.1} parent=11 // pred_fallthru
          _
        // Predicated region
        $region21: #{_rx_forward_jit.1} parent=11 // pred_check
          %p256 = pneg %p104
        $region22: #{_rx_forward_jit.1} parent=11 // pred_check_branch
          %258 = sbr.rel (%p256) target = $region24
        $region23: #{_rx_forward_jit.1} parent=11 // pred_region
          _
        $region24: #{_rx_forward_jit.1} parent=11 // pred_fallthru
          _
        // Predicated region
        $region25: #{_rx_forward_jit.1} parent=11 // pred_check
          %p259 = pneg %p125
        $region26: #{_rx_forward_jit.1} parent=11 // pred_check_branch
          %261 = sbr.rel (%p259) target = $region28
        $region27: #{_rx_forward_jit.1} parent=11 // pred_region
          _
        $region28: #{_rx_forward_jit.1} parent=11 // pred_fallthru
          _
        // Predicated region
        $region29: #{_rx_forward_jit.1} parent=11 // pred_check
          %p262 = pneg %p146
        $region30: #{_rx_forward_jit.1} parent=11 // pred_check_branch
          %264 = sbr.rel (%p262) target = $region32
        $region31: #{_rx_forward_jit.1} parent=11 // pred_region
          _
        $region32: #{_rx_forward_jit.1} parent=11 // pred_fallthru
          _
        // Predicated region
        $region33: #{_rx_forward_jit.1} parent=11 // pred_check
          %p265 = pneg %p167
        $region34: #{_rx_forward_jit.1} parent=11 // pred_check_branch
          %267 = sbr.rel (%p265) target = $region36
        $region35: #{_rx_forward_jit.1} parent=11 // pred_region
          _
        $region36: #{_rx_forward_jit.1} parent=11 // pred_fallthru
          _
        // Predicated region
        $region37: #{_rx_forward_jit.1} parent=11 // pred_check
          %p268 = pneg %p188
        $region38: #{_rx_forward_jit.1} parent=11 // pred_check_branch
          %270 = sbr.rel (%p268) target = $region40
        $region39: #{_rx_forward_jit.1} parent=11 // pred_region
          _
        $region40: #{_rx_forward_jit.1} parent=11 // pred_fallthru
          _
        // Predicated region
        $region41: #{_rx_forward_jit.1} parent=11 // pred_check
          %p271 = pneg %p209
        $region42: #{_rx_forward_jit.1} parent=11 // pred_check_branch
          %273 = sbr.rel (%p271) target = $region44
        $region43: #{_rx_forward_jit.1} parent=11 // pred_region
          _
        $region44: #{_rx_forward_jit.1} parent=11 // pred_fallthru
          _
      $region12: #{_rx_forward_jit.1} parent=5 // pred_fallthru
        _
      %p274 = scmp.lt.s32.totalorder %s15, 2
      // Predicated region
      $region45: #{_rx_forward_jit.1} parent=5 // pred_check
        %p275 = pneg %p274
      $region46: #{_rx_forward_jit.1} parent=5 // pred_check_branch
        %277 = sbr.rel (%p275) target = $region48
      $region47: #{_rx_forward_jit.1} parent=5 // pred_region
        // Predicated region
        $region49: #{_rx_forward_jit.1} parent=47 // pred_check
          %p278 = pneg %p35
        $region50: #{_rx_forward_jit.1} parent=47 // pred_check_branch
          %280 = sbr.rel (%p278) target = $region52
        $region51: #{_rx_forward_jit.1} parent=47 // pred_region
          %p281 = scmp.lt.s32.totalorder %s15, 1
          %s282 = scalar_select %p281, %s15, 1
          %s283 = smul.addr %s282, 4
          %s284 = scalar_lea.vmem %s0, %s283
        $region52: #{_rx_forward_jit.1} parent=47 // pred_fallthru
          _
      $region48: #{_rx_forward_jit.1} parent=5 // pred_fallthru
        _
      %p285 = scmp.le.s32.totalorder 1, %s15
      %p286 = scmp.lt.s32.totalorder %s15, 3
      %p287 = pnand %p285, %p286
      %p288 = pneg %p287
      // Predicated region
      $region53: #{_rx_forward_jit.1} parent=5 // pred_check
        _
      $region54: #{_rx_forward_jit.1} parent=5 // pred_check_branch
        %290 = sbr.rel (%p287) target = $region56
      $region55: #{_rx_forward_jit.1} parent=5 // pred_region
        %s291 = ssub.s32 %s15, 1
        %p292 = scmp.lt.s32.totalorder %s20, 1
        %s293 = scalar_select %p292, %s20, 1
        %s294 = smul.addr %s293, 4
        %s295 = scalar_lea.vmem %s0, %s294
        %p296 = pneg %p41
        %p297 = pneg %p38
        %p298 = pneg %p62
        %p299 = pneg %p59
        %p300 = pneg %p83
        %p301 = pneg %p80
        %p302 = pneg %p104
        %p303 = pneg %p101
        %p304 = pneg %p125
        %p305 = pneg %p122
        %p306 = pneg %p146
        %p307 = pneg %p143
        %p308 = pneg %p167
        %p309 = pneg %p164
        %p310 = pneg %p188
        %p311 = pneg %p185
        %p312 = pneg %p209
        %p313 = pneg %p206
        %p314 = pneg %p235
        %p315 = pneg %p232
        %s316 = sand.u32 %s222, 1
        %s317 = sand.u32 %s222, 1
        %s318 = smul.addr %s317, 40
        %s319 = scalar_lea.vmem [#allocation2], %s318
        %p320 = scmp.lt.s32.totalorder %s20, 1
        %s321 = scalar_select %p320, %s20, 1
        %s322 = smul.addr %s321, 4
        %s323 = scalar_lea.vmem %s0, %s322
        %v325 = vld [vmem:[%s1] sm:$0xf]
        %v326 = vld [vmem:[%s1 + $0x4] sm:$0xf]
        %v327 = vld [vmem:[%s1 + $0x8] sm:$0xf]
        %v328 = vld [vmem:[%s1 + $0xc] sm:$0xf]
        %v329 = vld [vmem:[%s1 + $0x10] sm:$0xf]
        %v330 = vld [vmem:[%s1 + $0x14] sm:$0xf]
        %v331 = vld [vmem:[%s1 + $0x18] sm:$0xf]
        %v332 = vld [vmem:[%s1 + $0x1c] sm:$0xf]
        %v333 = vld [vmem:[%s323] sm:$0x7]
        %v334 = vld [vmem:[%s2] sm:$0xff]
        %v335 = vld [vmem:[%s2 + $0x8] sm:$0xff]
        %v336 = vld [vmem:[%s2 + $0x10] sm:$0xff]
        %v337 = vld [vmem:[%s2 + $0x18] sm:$0xff]
        %v338 = vld [vmem:[%s2 + $0x20] sm:$0xff]
        %v339 = vld [vmem:[%s2 + $0x28] sm:$0xff]
        %v340 = vld [vmem:[%s2 + $0x30] sm:$0xff]
        %v341 = vld [vmem:[%s2 + $0x38] sm:$0xff]
        %343 = vset.pattern.permute.xlu0 0
        %344 = vperm.xlu0 %343, %v334
        %v345 = vpop.permute.xlu0 %344
        %348 = vset.pattern.permute.xlu0 0
        %349 = vperm.xlu0 %348, %v335
        %v350 = vpop.permute.xlu0 %349
        %353 = vset.pattern.permute.xlu0 0
        %354 = vperm.xlu0 %353, %v336
        %v355 = vpop.permute.xlu0 %354
        %358 = vset.pattern.permute.xlu0 0
        %359 = vperm.xlu0 %358, %v337
        %v360 = vpop.permute.xlu0 %359
        %363 = vset.pattern.permute.xlu0 0
        %364 = vperm.xlu0 %363, %v338
        %v365 = vpop.permute.xlu0 %364
        %368 = vset.pattern.permute.xlu0 0
        %369 = vperm.xlu0 %368, %v339
        %v370 = vpop.permute.xlu0 %369
        %373 = vset.pattern.permute.xlu0 0
        %374 = vperm.xlu0 %373, %v340
        %v375 = vpop.permute.xlu0 %374
        %378 = vset.pattern.permute.xlu0 0
        %379 = vperm.xlu0 %378, %v341
        %v380 = vpop.permute.xlu0 %379
        %v390 = vunpack.c.l.b16 %v325
        %v391 = vunpack.c.l.b16 %v326
        %v392 = vunpack.c.l.b16 %v327
        %v393 = vunpack.c.l.b16 %v328
        %v394 = vunpack.c.l.b16 %v329
        %v395 = vunpack.c.l.b16 %v330
        %v396 = vunpack.c.l.b16 %v331
        %v397 = vunpack.c.l.b16 %v332
        %v398 = vpack.c.b16 %v391, %v390
        %v399 = vpack.c.b16 %v393, %v392
        %v400 = vpack.c.b16 %v395, %v394
        %v401 = vpack.c.b16 %v397, %v396
        %vm402 = vcmask 48128
        %v404 = vsel %vm402, %v398, 0
        %v407 = vsel %vm402, %v399, 0
        %v410 = vsel %vm402, %v400, 0
        %v413 = vsel %vm402, %v401, 0
        %vm415 = vcmask 1042432
        %v417 = vsel %vm415, %v333, 0
        %419 = vmatprep.subr.bf16.mxu0 0
        %420 = vmatpush1.bf16.msra.mxu0 %v417
        %421 = vmatprep.subr.bf16.mxu0 0
        %422 = vmatpush1.bf16.msra.mxu0 0
        %423 = vmatprep.subr.bf16.mxu0 0
        %424 = vmatpush1.bf16.msra.mxu0 0
        %425 = vmatprep.subr.bf16.mxu0 0
        %426 = vmatpush1.bf16.msra.mxu0 0
        %427 = vmatprep.subr.bf16.mxu0 0
        %428 = vmatpush1.bf16.msra.mxu0 0
        %429 = vmatprep.subr.bf16.mxu0 0
        %430 = vmatpush1.bf16.msra.mxu0 0
        %431 = vmatprep.subr.bf16.mxu0 0
        %432 = vmatpush1.bf16.msra.mxu0 0
        %433 = vmatprep.subr.bf16.mxu0 0
        %434 = vmatpush1.bf16.msra.mxu0 0
        %435 = vmatprep.subr.bf16.mxu0 0
        %436 = vmatpush1.bf16.msra.mxu0 0
        %437 = vmatprep.subr.bf16.mxu0 0
        %438 = vmatpush1.bf16.msra.mxu0 0
        %439 = vmatprep.subr.bf16.mxu0 0
        %440 = vmatpush1.bf16.msra.mxu0 0
        %441 = vmatprep.subr.bf16.mxu0 0
        %442 = vmatpush1.bf16.msra.mxu0 0
        %443 = vmatprep.subr.bf16.mxu0 0
        %444 = vmatpush1.bf16.msra.mxu0 0
        %445 = vmatprep.subr.bf16.mxu0 0
        %446 = vmatpush1.bf16.msra.mxu0 0
        %447 = vmatprep.subr.bf16.mxu0 0
        %448 = vmatpush1.bf16.msra.mxu0 0
        %449 = vmatprep.subr.bf16.mxu0 0
        %450 = vmatpush1.bf16.msra.mxu0 0
        %451 = vmatprep.mubr.bf16.mxu0 0
        %452 = vmatmul.mubr.bf16.gmra.mrb[0].mxu0 %v404
        %v453 = vpop.f32.mrb[0].mxu0
        %v454 = vadd.f32 %v345, %v453
        %v455 = vpop.f32.mrb[0].mxu0
        %v456 = vpop.f32.mrb[0].mxu0
        %v457 = vadd.f32 %v350, %v456
        %v458 = vpop.f32.mrb[0].mxu0
        %459 = vmatprep.mubr.bf16.mxu0 0
        %460 = vmatmul.mubr.bf16.gmra.mrb[0].mxu0 %v407
        %v461 = vpop.f32.mrb[0].mxu0
        %v462 = vadd.f32 %v355, %v461
        %v463 = vpop.f32.mrb[0].mxu0
        %v464 = vpop.f32.mrb[0].mxu0
        %v465 = vadd.f32 %v360, %v464
        %v466 = vpop.f32.mrb[0].mxu0
        %467 = vmatprep.mubr.bf16.mxu0 0
        %468 = vmatmul.mubr.bf16.gmra.mrb[0].mxu0 %v410
        %v469 = vpop.f32.mrb[0].mxu0
        %v470 = vadd.f32 %v365, %v469
        %v471 = vpop.f32.mrb[0].mxu0
        %v472 = vpop.f32.mrb[0].mxu0
        %v473 = vadd.f32 %v370, %v472
        %v474 = vpop.f32.mrb[0].mxu0
        %475 = vmatprep.mubr.bf16.mxu0 0
        %476 = vmatmul.mubr.bf16.gmra.mrb[0].mxu0 %v413
        %v477 = vpop.f32.mrb[0].mxu0
        %v478 = vadd.f32 %v375, %v477
        %v479 = vpop.f32.mrb[0].mxu0
        %v480 = vpop.f32.mrb[0].mxu0
        %v481 = vadd.f32 %v380, %v480
        %v482 = vpop.f32.mrb[0].mxu0
        %483 = vdwg.mxu0
        %v484 = vmax.f32 %v454, 0.0
        %v485 = vmax.f32 %v457, 0.0
        %v486 = vmax.f32 %v462, 0.0
        %v487 = vmax.f32 %v465, 0.0
        %v488 = vmax.f32 %v470, 0.0
        %v489 = vmax.f32 %v473, 0.0
        %v490 = vmax.f32 %v478, 0.0
        %v491 = vmax.f32 %v481, 0.0
        %v492 = vpack.c.bf16 %v485, %v484
        %v493 = vpack.c.bf16 %v487, %v486
        %v494 = vpack.c.bf16 %v489, %v488
        %v495 = vpack.c.bf16 %v491, %v490
        %v496 = vld [vmem:[%s3] sm:$0xf]
        %v497 = vld [vmem:[%s3 + $0x4] sm:$0xf]
        %v498 = vld [vmem:[%s3 + $0x8] sm:$0xf]
        %v499 = vld [vmem:[%s3 + $0xc] sm:$0xf]
        %v500 = vld [vmem:[%s3 + $0x10] sm:$0xf]
        %v501 = vld [vmem:[%s3 + $0x14] sm:$0xf]
        %v502 = vld [vmem:[%s3 + $0x18] sm:$0xf]
        %v503 = vld [vmem:[%s3 + $0x1c] sm:$0xf]
        %v504 = vld [vmem:[%s4] sm:$0xff]
        %v505 = vld [vmem:[%s4 + $0x8] sm:$0xff]
        %v506 = vld [vmem:[%s4 + $0x10] sm:$0xff]
        %v507 = vld [vmem:[%s4 + $0x18] sm:$0xff]
        %v508 = vld [vmem:[%s4 + $0x20] sm:$0xff]
        %v509 = vld [vmem:[%s4 + $0x28] sm:$0xff]
        %v510 = vld [vmem:[%s4 + $0x30] sm:$0xff]
        %v511 = vld [vmem:[%s4 + $0x38] sm:$0xff]
        %513 = vset.pattern.permute.xlu0 0
        %514 = vperm.xlu0 %513, %v504
        %v515 = vpop.permute.xlu0 %514
        %518 = vset.pattern.permute.xlu0 0
        %519 = vperm.xlu0 %518, %v505
        %v520 = vpop.permute.xlu0 %519
        %523 = vset.pattern.permute.xlu0 0
        %524 = vperm.xlu0 %523, %v506
        %v525 = vpop.permute.xlu0 %524
        %528 = vset.pattern.permute.xlu0 0
        %529 = vperm.xlu0 %528, %v507
        %v530 = vpop.permute.xlu0 %529
        %533 = vset.pattern.permute.xlu0 0
        %534 = vperm.xlu0 %533, %v508
        %v535 = vpop.permute.xlu0 %534
        %538 = vset.pattern.permute.xlu0 0
        %539 = vperm.xlu0 %538, %v509
        %v540 = vpop.permute.xlu0 %539
        %543 = vset.pattern.permute.xlu0 0
        %544 = vperm.xlu0 %543, %v510
        %v545 = vpop.permute.xlu0 %544
        %548 = vset.pattern.permute.xlu0 0
        %549 = vperm.xlu0 %548, %v511
        %v550 = vpop.permute.xlu0 %549
        %v560 = vunpack.c.l.b16 %v496
        %v561 = vunpack.c.l.b16 %v497
        %v562 = vunpack.c.l.b16 %v498
        %v563 = vunpack.c.l.b16 %v499
        %v564 = vunpack.c.l.b16 %v500
        %v565 = vunpack.c.l.b16 %v501
        %v566 = vunpack.c.l.b16 %v502
        %v567 = vunpack.c.l.b16 %v503
        %v568 = vpack.c.b16 %v561, %v560
        %v569 = vpack.c.b16 %v563, %v562
        %v570 = vpack.c.b16 %v565, %v564
        %v571 = vpack.c.b16 %v567, %v566
        %vm572 = vcmask 523264
        %v574 = vsel %vm572, %v568, 0
        %v577 = vsel %vm572, %v569, 0
        %v580 = vsel %vm572, %v570, 0
        %v583 = vsel %vm572, %v571, 0
        %585 = vmatprep.subr.bf16.mxu0 0
        %586 = vmatpush1.bf16.msra.mxu0 %v492
        %587 = vmatprep.subr.bf16.mxu0 0
        %588 = vmatpush1.bf16.msra.mxu0 %v493
        %589 = vmatprep.subr.bf16.mxu0 0
        %590 = vmatpush1.bf16.msra.mxu0 %v494
        %591 = vmatprep.subr.bf16.mxu0 0
        %592 = vmatpush1.bf16.msra.mxu0 %v495
        %593 = vmatprep.subr.bf16.mxu0 0
        %594 = vmatpush1.bf16.msra.mxu0 0
        %595 = vmatprep.subr.bf16.mxu0 0
        %596 = vmatpush1.bf16.msra.mxu0 0
        %597 = vmatprep.subr.bf16.mxu0 0
        %598 = vmatpush1.bf16.msra.mxu0 0
        %599 = vmatprep.subr.bf16.mxu0 0
        %600 = vmatpush1.bf16.msra.mxu0 0
        %601 = vmatprep.subr.bf16.mxu0 0
        %602 = vmatpush1.bf16.msra.mxu0 0
        %603 = vmatprep.subr.bf16.mxu0 0
        %604 = vmatpush1.bf16.msra.mxu0 0
        %605 = vmatprep.subr.bf16.mxu0 0
        %606 = vmatpush1.bf16.msra.mxu0 0
        %607 = vmatprep.subr.bf16.mxu0 0
        %608 = vmatpush1.bf16.msra.mxu0 0
        %609 = vmatprep.subr.bf16.mxu0 0
        %610 = vmatpush1.bf16.msra.mxu0 0
        %611 = vmatprep.subr.bf16.mxu0 0
        %612 = vmatpush1.bf16.msra.mxu0 0
        %613 = vmatprep.subr.bf16.mxu0 0
        %614 = vmatpush1.bf16.msra.mxu0 0
        %615 = vmatprep.subr.bf16.mxu0 0
        %616 = vmatpush1.bf16.msra.mxu0 0
        %617 = vmatprep.mubr.bf16.mxu0 0
        %618 = vmatmul.mubr.bf16.gmra.mrb[0].mxu0 %v574
        %v619 = vpop.f32.mrb[0].mxu0
        %v620 = vadd.f32 %v515, %v619
        %v621 = vpop.f32.mrb[0].mxu0
        %v622 = vpop.f32.mrb[0].mxu0
        %v623 = vadd.f32 %v520, %v622
        %v624 = vpop.f32.mrb[0].mxu0
        %625 = vmatprep.mubr.bf16.mxu0 0
        %626 = vmatmul.mubr.bf16.gmra.mrb[0].mxu0 %v577
        %v627 = vpop.f32.mrb[0].mxu0
        %v628 = vadd.f32 %v525, %v627
        %v629 = vpop.f32.mrb[0].mxu0
        %v630 = vpop.f32.mrb[0].mxu0
        %v631 = vadd.f32 %v530, %v630
        %v632 = vpop.f32.mrb[0].mxu0
        %633 = vmatprep.mubr.bf16.mxu0 0
        %634 = vmatmul.mubr.bf16.gmra.mrb[0].mxu0 %v580
        %v635 = vpop.f32.mrb[0].mxu0
        %v636 = vadd.f32 %v535, %v635
        %v637 = vpop.f32.mrb[0].mxu0
        %v638 = vpop.f32.mrb[0].mxu0
        %v639 = vadd.f32 %v540, %v638
        %v640 = vpop.f32.mrb[0].mxu0
        %641 = vmatprep.mubr.bf16.mxu0 0
        %642 = vmatmul.mubr.bf16.gmra.mrb[0].mxu0 %v583
        %v643 = vpop.f32.mrb[0].mxu0
        %v644 = vadd.f32 %v545, %v643
        %v645 = vpop.f32.mrb[0].mxu0
        %v646 = vpop.f32.mrb[0].mxu0
        %v647 = vadd.f32 %v550, %v646
        %v648 = vpop.f32.mrb[0].mxu0
        %649 = vdwg.mxu0
        %v650 = vmax.f32 %v620, 0.0
        %v651 = vmax.f32 %v623, 0.0
        %v652 = vmax.f32 %v628, 0.0
        %v653 = vmax.f32 %v631, 0.0
        %v654 = vmax.f32 %v636, 0.0
        %v655 = vmax.f32 %v639, 0.0
        %v656 = vmax.f32 %v644, 0.0
        %v657 = vmax.f32 %v647, 0.0
        %v658 = vpack.c.bf16 %v651, %v650
        %v659 = vpack.c.bf16 %v653, %v652
        %v660 = vpack.c.bf16 %v655, %v654
        %v661 = vpack.c.bf16 %v657, %v656
        %v662 = vld [vmem:[%s5] sm:$0xf]
        %v663 = vld [vmem:[%s5 + $0x4] sm:$0xf]
        %v664 = vld [vmem:[%s5 + $0x8] sm:$0xf]
        %v665 = vld [vmem:[%s5 + $0xc] sm:$0xf]
        %v666 = vld [vmem:[%s5 + $0x10] sm:$0xf]
        %v667 = vld [vmem:[%s5 + $0x14] sm:$0xf]
        %v668 = vld [vmem:[%s5 + $0x18] sm:$0xf]
        %v669 = vld [vmem:[%s5 + $0x1c] sm:$0xf]
        %v670 = vld [vmem:[%s6] sm:$0xff]
        %v671 = vld [vmem:[%s6 + $0x8] sm:$0xff]
        %v672 = vld [vmem:[%s6 + $0x10] sm:$0xff]
        %v673 = vld [vmem:[%s6 + $0x18] sm:$0xff]
        %v674 = vld [vmem:[%s6 + $0x20] sm:$0xff]
        %v675 = vld [vmem:[%s6 + $0x28] sm:$0xff]
        %v676 = vld [vmem:[%s6 + $0x30] sm:$0xff]
        %v677 = vld [vmem:[%s6 + $0x38] sm:$0xff]
        %679 = vset.pattern.permute.xlu0 0
        %680 = vperm.xlu0 %679, %v670
        %v681 = vpop.permute.xlu0 %680
        %684 = vset.pattern.permute.xlu0 0
        %685 = vperm.xlu0 %684, %v671
        %v686 = vpop.permute.xlu0 %685
        %689 = vset.pattern.permute.xlu0 0
        %690 = vperm.xlu0 %689, %v672
        %v691 = vpop.permute.xlu0 %690
        %694 = vset.pattern.permute.xlu0 0
        %695 = vperm.xlu0 %694, %v673
        %v696 = vpop.permute.xlu0 %695
        %699 = vset.pattern.permute.xlu0 0
        %700 = vperm.xlu0 %699, %v674
        %v701 = vpop.permute.xlu0 %700
        %704 = vset.pattern.permute.xlu0 0
        %705 = vperm.xlu0 %704, %v675
        %v706 = vpop.permute.xlu0 %705
        %709 = vset.pattern.permute.xlu0 0
        %710 = vperm.xlu0 %709, %v676
        %v711 = vpop.permute.xlu0 %710
        %714 = vset.pattern.permute.xlu0 0
        %715 = vperm.xlu0 %714, %v677
        %v716 = vpop.permute.xlu0 %715
        %v726 = vunpack.c.l.b16 %v662
        %v727 = vunpack.c.l.b16 %v663
        %v728 = vunpack.c.l.b16 %v664
        %v729 = vunpack.c.l.b16 %v665
        %v730 = vunpack.c.l.b16 %v666
        %v731 = vunpack.c.l.b16 %v667
        %v732 = vunpack.c.l.b16 %v668
        %v733 = vunpack.c.l.b16 %v669
        %v734 = vpack.c.b16 %v727, %v726
        %v735 = vpack.c.b16 %v729, %v728
        %v736 = vpack.c.b16 %v731, %v730
        %v737 = vpack.c.b16 %v733, %v732
        %v739 = vsel %vm572, %v734, 0
        %v742 = vsel %vm572, %v735, 0
        %v745 = vsel %vm572, %v736, 0
        %v748 = vsel %vm572, %v737, 0
        %750 = vmatprep.subr.bf16.mxu0 0
        %751 = vmatpush1.bf16.msra.mxu0 %v658
        %752 = vmatprep.subr.bf16.mxu0 0
        %753 = vmatpush1.bf16.msra.mxu0 %v659
        %754 = vmatprep.subr.bf16.mxu0 0
        %755 = vmatpush1.bf16.msra.mxu0 %v660
        %756 = vmatprep.subr.bf16.mxu0 0
        %757 = vmatpush1.bf16.msra.mxu0 %v661
        %758 = vmatprep.subr.bf16.mxu0 0
        %759 = vmatpush1.bf16.msra.mxu0 0
        %760 = vmatprep.subr.bf16.mxu0 0
        %761 = vmatpush1.bf16.msra.mxu0 0
        %762 = vmatprep.subr.bf16.mxu0 0
        %763 = vmatpush1.bf16.msra.mxu0 0
        %764 = vmatprep.subr.bf16.mxu0 0
        %765 = vmatpush1.bf16.msra.mxu0 0
        %766 = vmatprep.subr.bf16.mxu0 0
        %767 = vmatpush1.bf16.msra.mxu0 0
        %768 = vmatprep.subr.bf16.mxu0 0
        %769 = vmatpush1.bf16.msra.mxu0 0
        %770 = vmatprep.subr.bf16.mxu0 0
        %771 = vmatpush1.bf16.msra.mxu0 0
        %772 = vmatprep.subr.bf16.mxu0 0
        %773 = vmatpush1.bf16.msra.mxu0 0
        %774 = vmatprep.subr.bf16.mxu0 0
        %775 = vmatpush1.bf16.msra.mxu0 0
        %776 = vmatprep.subr.bf16.mxu0 0
        %777 = vmatpush1.bf16.msra.mxu0 0
        %778 = vmatprep.subr.bf16.mxu0 0
        %779 = vmatpush1.bf16.msra.mxu0 0
        %780 = vmatprep.subr.bf16.mxu0 0
        %781 = vmatpush1.bf16.msra.mxu0 0
        %782 = vmatprep.mubr.bf16.mxu0 0
        %783 = vmatmul.mubr.bf16.gmra.mrb[0].mxu0 %v739
        %v784 = vpop.f32.mrb[0].mxu0
        %v785 = vadd.f32 %v681, %v784
        %v786 = vpop.f32.mrb[0].mxu0
        %v787 = vpop.f32.mrb[0].mxu0
        %v788 = vadd.f32 %v686, %v787
        %v789 = vpop.f32.mrb[0].mxu0
        %790 = vmatprep.mubr.bf16.mxu0 0
        %791 = vmatmul.mubr.bf16.gmra.mrb[0].mxu0 %v742
        %v792 = vpop.f32.mrb[0].mxu0
        %v793 = vadd.f32 %v691, %v792
        %v794 = vpop.f32.mrb[0].mxu0
        %v795 = vpop.f32.mrb[0].mxu0
        %v796 = vadd.f32 %v696, %v795
        %v797 = vpop.f32.mrb[0].mxu0
        %798 = vmatprep.mubr.bf16.mxu0 0
        %799 = vmatmul.mubr.bf16.gmra.mrb[0].mxu0 %v745
        %v800 = vpop.f32.mrb[0].mxu0
        %v801 = vadd.f32 %v701, %v800
        %v802 = vpop.f32.mrb[0].mxu0
        %v803 = vpop.f32.mrb[0].mxu0
        %v804 = vadd.f32 %v706, %v803
        %v805 = vpop.f32.mrb[0].mxu0
        %806 = vmatprep.mubr.bf16.mxu0 0
        %807 = vmatmul.mubr.bf16.gmra.mrb[0].mxu0 %v748
        %v808 = vpop.f32.mrb[0].mxu0
        %v809 = vadd.f32 %v711, %v808
        %v810 = vpop.f32.mrb[0].mxu0
        %v811 = vpop.f32.mrb[0].mxu0
        %v812 = vadd.f32 %v716, %v811
        %v813 = vpop.f32.mrb[0].mxu0
        %814 = vdwg.mxu0
        %v815 = vmax.f32 %v785, 0.0
        %v816 = vmax.f32 %v788, 0.0
        %v817 = vmax.f32 %v793, 0.0
        %v818 = vmax.f32 %v796, 0.0
        %v819 = vmax.f32 %v801, 0.0
        %v820 = vmax.f32 %v804, 0.0
        %v821 = vmax.f32 %v809, 0.0
        %v822 = vmax.f32 %v812, 0.0
        %v823 = vpack.c.bf16 %v816, %v815
        %v824 = vpack.c.bf16 %v818, %v817
        %v825 = vpack.c.bf16 %v820, %v819
        %v826 = vpack.c.bf16 %v822, %v821
        %v827 = vld [vmem:[%s7] sm:$0xf]
        %v828 = vld [vmem:[%s7 + $0x4] sm:$0xf]
        %v829 = vld [vmem:[%s7 + $0x8] sm:$0xf]
        %v830 = vld [vmem:[%s7 + $0xc] sm:$0xf]
        %v831 = vld [vmem:[%s7 + $0x10] sm:$0xf]
        %v832 = vld [vmem:[%s8] sm:$0xff]
        %v833 = vld [vmem:[%s8 + $0x8] sm:$0xff]
        %v834 = vld [vmem:[%s8 + $0x10] sm:$0xff]
        %v835 = vld [vmem:[%s8 + $0x18] sm:$0xff]
        %v836 = vld [vmem:[%s8 + $0x20] sm:$0xff]
        %838 = vset.pattern.permute.xlu0 0
        %839 = vperm.xlu0 %838, %v832
        %v840 = vpop.permute.xlu0 %839
        %843 = vset.pattern.permute.xlu0 0
        %844 = vperm.xlu0 %843, %v833
        %v845 = vpop.permute.xlu0 %844
        %848 = vset.pattern.permute.xlu0 0
        %849 = vperm.xlu0 %848, %v834
        %v850 = vpop.permute.xlu0 %849
        %853 = vset.pattern.permute.xlu0 0
        %854 = vperm.xlu0 %853, %v835
        %v855 = vpop.permute.xlu0 %854
        %858 = vset.pattern.permute.xlu0 0
        %859 = vperm.xlu0 %858, %v836
        %v860 = vpop.permute.xlu0 %859
        %v867 = vunpack.c.l.b16 %v827
        %v868 = vunpack.c.l.b16 %v828
        %v869 = vunpack.c.l.b16 %v829
        %v870 = vunpack.c.l.b16 %v830
        %v871 = vunpack.c.l.b16 %v831
        %v872 = vpack.c.b16 %v868, %v867
        %v873 = vpack.c.b16 %v870, %v869
        %v874 = vpack.c.b16 %v871, %v871
        %v876 = vsel %vm572, %v872, 0
        %v879 = vsel %vm572, %v873, 0
        %v882 = vsel %vm572, %v874, 0
        %884 = vmatprep.subr.bf16.mxu0 0
        %885 = vmatpush1.bf16.msra.mxu0 %v823
        %886 = vmatprep.subr.bf16.mxu0 0
        %887 = vmatpush1.bf16.msra.mxu0 %v824
        %888 = vmatprep.subr.bf16.mxu0 0
        %889 = vmatpush1.bf16.msra.mxu0 %v825
        %890 = vmatprep.subr.bf16.mxu0 0
        %891 = vmatpush1.bf16.msra.mxu0 %v826
        %892 = vmatprep.subr.bf16.mxu0 0
        %893 = vmatpush1.bf16.msra.mxu0 0
        %894 = vmatprep.subr.bf16.mxu0 0
        %895 = vmatpush1.bf16.msra.mxu0 0
        %896 = vmatprep.subr.bf16.mxu0 0
        %897 = vmatpush1.bf16.msra.mxu0 0
        %898 = vmatprep.subr.bf16.mxu0 0
        %899 = vmatpush1.bf16.msra.mxu0 0
        %900 = vmatprep.subr.bf16.mxu0 0
        %901 = vmatpush1.bf16.msra.mxu0 0
        %902 = vmatprep.subr.bf16.mxu0 0
        %903 = vmatpush1.bf16.msra.mxu0 0
        %904 = vmatprep.subr.bf16.mxu0 0
        %905 = vmatpush1.bf16.msra.mxu0 0
        %906 = vmatprep.subr.bf16.mxu0 0
        %907 = vmatpush1.bf16.msra.mxu0 0
        %908 = vmatprep.subr.bf16.mxu0 0
        %909 = vmatpush1.bf16.msra.mxu0 0
        %910 = vmatprep.subr.bf16.mxu0 0
        %911 = vmatpush1.bf16.msra.mxu0 0
        %912 = vmatprep.subr.bf16.mxu0 0
        %913 = vmatpush1.bf16.msra.mxu0 0
        %914 = vmatprep.subr.bf16.mxu0 0
        %915 = vmatpush1.bf16.msra.mxu0 0
        %916 = vmatprep.mubr.bf16.mxu0 0
        %917 = vmatmul.mubr.bf16.gmra.mrb[0].mxu0 %v876
        %v918 = vpop.f32.mrb[0].mxu0
        %v919 = vadd.f32 %v840, %v918
        %v920 = vpop.f32.mrb[0].mxu0
        %v921 = vpop.f32.mrb[0].mxu0
        %v922 = vadd.f32 %v845, %v921
        %v923 = vpop.f32.mrb[0].mxu0
        %924 = vmatprep.mubr.bf16.mxu0 0
        %925 = vmatmul.mubr.bf16.gmra.mrb[0].mxu0 %v879
        %v926 = vpop.f32.mrb[0].mxu0
        %v927 = vadd.f32 %v850, %v926
        %v928 = vpop.f32.mrb[0].mxu0
        %v929 = vpop.f32.mrb[0].mxu0
        %v930 = vadd.f32 %v855, %v929
        %v931 = vpop.f32.mrb[0].mxu0
        %932 = vmatprep.mubr.bf16.mxu0 0
        %933 = vmatmul.mubr.bf16.gmra.mrb[0].mxu0 %v882
        %v934 = vpop.f32.mrb[0].mxu0
        %v935 = vadd.f32 %v860, %v934
        %v936 = vpop.f32.mrb[0].mxu0
        %v937 = vpop.f32.mrb[0].mxu0
        %v938 = vpop.f32.mrb[0].mxu0
        %939 = vdwg.mxu0
        %940 = vst [vmem:[%s319] sm:$0xff] %v919
        %941 = vst [vmem:[%s319 + $0x8] sm:$0xff] %v922
        %942 = vst [vmem:[%s319 + $0x10] sm:$0xff] %v927
        %943 = vst [vmem:[%s319 + $0x18] sm:$0xff] %v930
        %944 = vst [vmem:[%s319 + $0x20] sm:$0xff] %v935
        %s945 = sand.u32 %s222, 1
        %s946 = sand.u32 %s222, 1
        %s947 = smul.addr %s946, 40
        %s948 = scalar_lea.vmem [#allocation2], %s947
        // Predicated region
        $region57: #{_rx_forward_jit.1} parent=55 // pred_check
          %p949 = pneg %p232
        $region58: #{_rx_forward_jit.1} parent=55 // pred_check_branch
          %951 = sbr.rel (%p949) target = $region60
        $region59: #{_rx_forward_jit.1} parent=55 // pred_region
          %s952 = smul.addr %s20, 8
          %s953 = scalar_lea.vmem %s9, %s952
          // Predicated region
          $region61: #{_rx_forward_jit.1} parent=59 // pred_check
            _
          $region62: #{_rx_forward_jit.1} parent=59 // pred_check_branch
            %955 = sbr.rel (0) target = $region64
          $region63: #{_rx_forward_jit.1} parent=59 // pred_region
            // Predicated region
            $region65: #{_rx_forward_jit.1} parent=63 // pred_check
              _
            $region66: #{_rx_forward_jit.1} parent=63 // pred_check_branch
              %957 = sbr.rel (0) target = $region68
            $region67: #{_rx_forward_jit.1} parent=63 // pred_region
              // Predicated region
              $region80: #{_rx_forward_jit.1} parent=67 // pred_check
                _
              $region81: #{_rx_forward_jit.1} parent=67 // pred_check_branch
                %980 = sbr.rel (0) target = $region83
              $region82: #{_rx_forward_jit.1} parent=67 // pred_region
                loop: start=0, step=1, limit=1
                $region84: #{_rx_forward_jit.1} parent=82 // loop_pre_header
                  _
                $region85: #{_rx_forward_jit.1} parent=82 // loop_header
                  %s982 = sphi 0, %s986
                  %p983 = scmp.ge.s32.totalorder %s982, 1
                  %s987 = sphi %s948, %s948
                  %s988 = sphi %s953, %s953
                $region86: #{_rx_forward_jit.1} parent=82 // loop_header_branch
                  %985 = sbr.rel (%p983) target = $region90
                $region87: #{_rx_forward_jit.1} parent=82 // loop_body
                  %v989 = vld [vmem:[%s987] sm:$0xff]
                  %990 = vst [vmem:[%s988] sm:$0xff] %v989
                  %v991 = vld [vmem:[%s987 + $0x8] sm:$0xff]
                  %992 = vst [vmem:[%s988 + $0x10] sm:$0xff] %v991
                  %v993 = vld [vmem:[%s987 + $0x10] sm:$0xff]
                  %994 = vst [vmem:[%s988 + $0x20] sm:$0xff] %v993
                  %v995 = vld [vmem:[%s987 + $0x18] sm:$0xff]
                  %996 = vst [vmem:[%s988 + $0x30] sm:$0xff] %v995
                  %v997 = vld [vmem:[%s987 + $0x20] sm:$0xff]
                  %998 = vst [vmem:[%s988 + $0x40] sm:$0xff] %v997
                $region88: #{_rx_forward_jit.1} parent=82 // loop_footer
                  %s986 = sadd.s32 1, %s982
                $region89: #{_rx_forward_jit.1} parent=82 // loop_footer_branch
                  %981 = sbr.rel target = $region85
                $region90: #{_rx_forward_jit.1} parent=82 // loop_exit
                  _
              $region83: #{_rx_forward_jit.1} parent=67 // pred_fallthru
                _
              // Predicated region
              $region91: #{_rx_forward_jit.1} parent=67 // pred_check
                _
              $region92: #{_rx_forward_jit.1} parent=67 // pred_check_branch
                %1000 = sbr.rel target = $region94
              $region93: #{_rx_forward_jit.1} parent=67 // pred_region
                _
              $region94: #{_rx_forward_jit.1} parent=67 // pred_fallthru
                _
            $region68: #{_rx_forward_jit.1} parent=63 // pred_fallthru
              _
            // Predicated region
            $region69: #{_rx_forward_jit.1} parent=63 // pred_check
              _
            $region70: #{_rx_forward_jit.1} parent=63 // pred_check_branch
              %959 = sbr.rel target = $region72
            $region71: #{_rx_forward_jit.1} parent=63 // pred_region
              loop: start=0, step=1, limit=1
              $region73: #{_rx_forward_jit.1} parent=71 // loop_pre_header
                _
              $region74: #{_rx_forward_jit.1} parent=71 // loop_header
                %s962 = sphi 0, %s966
                %p963 = scmp.ge.s32.totalorder %s962, 1
                %s967 = sphi %s948, %s948
                %s968 = sphi %s953, %s953
              $region75: #{_rx_forward_jit.1} parent=71 // loop_header_branch
                %965 = sbr.rel (%p963) target = $region79
              $region76: #{_rx_forward_jit.1} parent=71 // loop_body
                %v969 = vld [vmem:[%s967] sm:$0xff]
                %970 = vst [vmem:[%s968] sm:$0xff] %v969
                %v971 = vld [vmem:[%s967 + $0x8] sm:$0xff]
                %972 = vst [vmem:[%s968 + $0x10] sm:$0xff] %v971
                %v973 = vld [vmem:[%s967 + $0x10] sm:$0xff]
                %974 = vst [vmem:[%s968 + $0x20] sm:$0xff] %v973
                %v975 = vld [vmem:[%s967 + $0x18] sm:$0xff]
                %976 = vst [vmem:[%s968 + $0x30] sm:$0xff] %v975
                %v977 = vld [vmem:[%s967 + $0x20] sm:$0xff]
                %978 = vst [vmem:[%s968 + $0x40] sm:$0xff] %v977
              $region77: #{_rx_forward_jit.1} parent=71 // loop_footer
                %s966 = sadd.s32 1, %s962
              $region78: #{_rx_forward_jit.1} parent=71 // loop_footer_branch
                %961 = sbr.rel target = $region74
              $region79: #{_rx_forward_jit.1} parent=71 // loop_exit
                _
            $region72: #{_rx_forward_jit.1} parent=63 // pred_fallthru
              _
          $region64: #{_rx_forward_jit.1} parent=59 // pred_fallthru
            _
          %1001 = vnop
        $region60: #{_rx_forward_jit.1} parent=55 // pred_fallthru
          _
      $region56: #{_rx_forward_jit.1} parent=5 // pred_fallthru
        _
      %p1002 = scmp.le.s32.totalorder 2, %s15
      // Predicated region
      $region95: #{_rx_forward_jit.1} parent=5 // pred_check
        %p1003 = pneg %p1002
      $region96: #{_rx_forward_jit.1} parent=5 // pred_check_branch
        %1005 = sbr.rel (%p1003) target = $region98
      $region97: #{_rx_forward_jit.1} parent=5 // pred_region
        %s1006 = ssub.s32 %s15, 2
        // Predicated region
        $region99: #{_rx_forward_jit.1} parent=97 // pred_check
          %p1007 = pneg %p238
        $region100: #{_rx_forward_jit.1} parent=97 // pred_check_branch
          %1009 = sbr.rel (%p1007) target = $region102
        $region101: #{_rx_forward_jit.1} parent=97 // pred_region
          %s1010 = sand.u32 %s223, 1
          %s1011 = sand.u32 %s223, 1
          %s1012 = smul.addr %s1011, 40
          %s1013 = scalar_lea.vmem [#allocation2], %s1012
        $region102: #{_rx_forward_jit.1} parent=97 // pred_fallthru
          _
      $region98: #{_rx_forward_jit.1} parent=5 // pred_fallthru
        _
    $region6: #{_rx_forward_jit.1} parent=1 // loop_footer
      %s19 = sadd.s32 1, %s15
    $region7: #{_rx_forward_jit.1} parent=1 // loop_footer_branch
      %14 = sbr.rel target = $region3
    $region8: #{_rx_forward_jit.1} parent=1 // loop_exit
      _

</llo_original>
